<compile_context>
chip_gen: v7x
topology: tpu7x:2x2x1
jax: 0.10.0
libtpu: 0.0.40
codegen_flags: <defaults>
</compile_context>

<pallas_src>
import numpy as np
import jax
import jax.numpy as jnp
from jax.experimental import pallas as pl
from jax.experimental.pallas import tpu as pltpu


def _round_up(n, m):
    return ((n + m - 1) // m) * m


# ---------------------------------------------------------------------------
# Fused kernel: stacked single-step LSTM (zero init state) + final Linear
# ---------------------------------------------------------------------------
def fused_bert_lstm_kernel(x_ref, w_ref, b_ref, fcw_ref, fcb_ref, out_ref):
    """x_ref:   (TB, D)      bf16   activations (batch tile)
       w_ref:   (L, D, 3H)   bf16   packed [i|g|o] input-to-hidden weights
       b_ref:   (L, 1, 3H)   f32    packed (b_ih + b_hh) biases
       fcw_ref: (H, Cp)      bf16   FC weight, columns zero-padded to Cp=128
       fcb_ref: (1, Cp)      f32    FC bias, zero-padded
       out_ref: (TB, Cp)     f32
    D = max(input_size, hidden_size); layer-0 weight rows (and x features) are
    zero-padded host-side to D, which is exact.
    """
    L, D, G = w_ref.shape
    H = G // 3

    h = x_ref[...]                                        # (TB, D) bf16, stays in vregs
    for layer in range(L):                                # static unroll (L is tiny)
        w_l = w_ref[layer]                                # (D, 3H) bf16
        if layer > 0 and D > H:
            w_l = w_l[:H, :]                              # layers>=1 only use H input rows
        # single fused gate matmul (f32 accumulate), bias add in f32
        gates = (jnp.dot(h, w_l, preferred_element_type=jnp.float32)
                 + b_ref[layer])                          # (TB, 3H) f32
        i_g = jax.nn.sigmoid(gates[:, 0 * H:1 * H])
        g_g = jnp.tanh(gates[:, 1 * H:2 * H])
        o_g = jax.nn.sigmoid(gates[:, 2 * H:3 * H])
        # c = i*g (forget path multiplies c_prev == 0), h = o * tanh(c)
        h = (o_g * jnp.tanh(i_g * g_g)).astype(jnp.bfloat16)   # (TB, H) bf16

    out_ref[...] = (jnp.dot(h, fcw_ref[...], preferred_element_type=jnp.float32)
                    + fcb_ref[...])                       # (TB, Cp) f32, lane-dense store


# ---------------------------------------------------------------------------
# Wrapper
# ---------------------------------------------------------------------------
def bert_lstm_forward(x, params, num_classes, *, batch_tile=1024):
    w, b = params["w"], params["b"]                       # f32 masters
    fc_w, fc_b = params["fc_w"], params["fc_b"]

    L, D, G = w.shape
    H = G // 3
    Cp = fc_w.shape[1]
    B = x.shape[0]

    # zero-pad input features up to D (exact: matching weight rows are zero)
    if x.shape[1] < D:
        x = jnp.pad(x, ((0, 0), (0, D - x.shape[1])))

    # batch tile: multiple of 16 (bf16 sublane packing), at least 2 grid steps
    # when B allows so the "parallel" grid axis can shard across v7x's two TCs.
    TB = max(16, _round_up(min(batch_tile, pl.cdiv(B, 2)), 16))
    B_pad = _round_up(B, TB)
    if B_pad > B:
        x = jnp.pad(x, ((0, B_pad - B), (0, 0)))          # full tiles -> unmasked stores
    grid = (B_pad // TB,)

    # bf16 into the MXU; biases / accum / gate math stay f32
    x_bf = x.astype(jnp.bfloat16)
    w_bf = w.astype(jnp.bfloat16)
    fcw_bf = fc_w.astype(jnp.bfloat16)

    def resident(shape):
        # whole-array block, same block every step -> stays VMEM-resident
        return pl.BlockSpec(shape, lambda i, _n=len(shape): (0,) * _n)

    flops = 2 * B_pad * (D * G + (L - 1) * H * G + H * Cp)
    transcendentals = 4 * B_pad * H * L                   # 2 sigmoid + 2 tanh / elem / layer
    bytes_accessed = (2 * x_bf.size + 2 * w_bf.size + 4 * b.size
                      + 2 * fcw_bf.size + 4 * fc_b.size + 4 * B_pad * Cp)

    out = pl.pallas_call(
        fused_bert_lstm_kernel,
        out_shape=jax.ShapeDtypeStruct((B_pad, Cp), jnp.float32),
        grid=grid,
        in_specs=[
            pl.BlockSpec((TB, D), lambda i: (i, 0)),      # batch tile of activations
            resident((L, D, G)),                          # packed LSTM weights
            resident((L, 1, G)),                          # packed LSTM biases
            resident((H, Cp)),                            # FC weight (lane-padded)
            resident((1, Cp)),                            # FC bias (lane-padded)
        ],
        out_specs=pl.BlockSpec((TB, Cp), lambda i: (i, 0)),
        compiler_params=pltpu.CompilerParams(
            dimension_semantics=("parallel",)),           # batch grid -> both TCs on v7x
        cost_estimate=pl.CostEstimate(
            flops=flops, transcendentals=transcendentals,
            bytes_accessed=bytes_accessed),
    )(x_bf, w_bf, b, fcw_bf, fc_b)

    return out[:B, :num_classes]


# ---------------------------------------------------------------------------
# Deterministic parameter init (matches nn.LSTM / nn.Linear shapes & init range)
# with host-side gate fusion ([i|g|o], forget gate dropped), row padding to D,
# layer stacking, and FC lane-padding to 128 columns.
# ---------------------------------------------------------------------------
def init_params(key, input_size, hidden_size, num_layers, num_classes):
    H = hidden_size
    D = max(input_size, hidden_size)
    G = 3 * H
    bound = 1.0 / np.sqrt(hidden_size)

    w_layers, b_layers = [], []
    for layer in range(num_layers):
        in_l = input_size if layer == 0 else hidden_size
        key, k1, k2, k3, k4 = jax.random.split(key, 5)
        w_ih = jax.random.uniform(k1, (4 * H, in_l),
                                  minval=-bound, maxval=bound, dtype=jnp.float32)
        # weight_hh exists in the PyTorch module but multiplies h_prev == 0 here,
        # so it never contributes (still drawn for key parity).
        _w_hh = jax.random.uniform(k2, (4 * H, H),
                                   minval=-bound, maxval=bound, dtype=jnp.float32)
        b_ih = jax.random.uniform(k3, (4 * H,),
                                  minval=-bound, maxval=bound, dtype=jnp.float32)
        b_hh = jax.random.uniform(k4, (4 * H,),
                                  minval=-bound, maxval=bound, dtype=jnp.float32)
        bsum = b_ih + b_hh

        w_t = w_ih.T                                      # (in_l, 4H), gate order [i,f,g,o]
        # fuse gates host-side; drop the forget gate (f * c_prev == 0)
        w_pack = jnp.concatenate(
            [w_t[:, 0 * H:1 * H], w_t[:, 2 * H:3 * H], w_t[:, 3 * H:4 * H]], axis=1)
        b_pack = jnp.concatenate(
            [bsum[0 * H:1 * H], bsum[2 * H:3 * H], bsum[3 * H:4 * H]]).reshape(1, G)

        if in_l < D:                                      # zero rows: exact padding
            w_pack = jnp.concatenate(
                [w_pack, jnp.zeros((D - in_l, G), jnp.float32)], axis=0)

        w_layers.append(w_pack)
        b_layers.append(b_pack)

    key, k5, k6 = jax.random.split(key, 3)
    fbound = 1.0 / np.sqrt(hidden_size)
    fc_w = jax.random.uniform(k5, (num_classes, hidden_size),
                              minval=-fbound, maxval=fbound, dtype=jnp.float32)
    fc_b = jax.random.uniform(k6, (num_classes,),
                              minval=-fbound, maxval=fbound, dtype=jnp.float32)

    Cp = max(128, _round_up(num_classes, 128))            # lane-dense output width
    fc_w_p = jnp.zeros((H, Cp), jnp.float32).at[:, :num_classes].set(fc_w.T)
    fc_b_p = jnp.zeros((1, Cp), jnp.float32).at[0, :num_classes].set(fc_b)

    return {"w": jnp.stack(w_layers), "b": jnp.stack(b_layers),
            "fc_w": fc_w_p, "fc_b": fc_b_p}


# ---------------------------------------------------------------------------
# Pure-JAX f32 reference (same simplified math) for a correctness check
# ---------------------------------------------------------------------------
def reference_forward(x, params):
    w, b = params["w"], params["b"]
    L, D, G = w.shape
    H = G // 3
    if x.shape[1] < D:
        x = jnp.pad(x, ((0, 0), (0, D - x.shape[1])))
    h = x
    for layer in range(L):
        w_l = w[layer]
        if layer > 0 and D > H:
            w_l = w_l[:H, :]
        gates = h @ w_l + b[layer]
        i = jax.nn.sigmoid(gates[:, 0 * H:1 * H])
        g = jnp.tanh(gates[:, 1 * H:2 * H])
        o = jax.nn.sigmoid(gates[:, 2 * H:3 * H])
        h = o * jnp.tanh(i * g)
    return h @ params["fc_w"] + params["fc_b"]            # (B, Cp)


# ---------------------------------------------------------------------------
if __name__ == "__main__":
    INPUT_SIZE = 32     # BERT-embedding dim (small synthetic size)
    HIDDEN_SIZE = 32
    NUM_LAYERS = 2
    NUM_CLASSES = 8
    BATCH = 8

    key = jax.random.PRNGKey(0)
    key, kx = jax.random.split(key)
    x = jax.random.normal(kx, (BATCH, INPUT_SIZE), dtype=jnp.float32)

    params = init_params(key, INPUT_SIZE, HIDDEN_SIZE, NUM_LAYERS, NUM_CLASSES)

    out = jax.block_until_ready(bert_lstm_forward(x, params, NUM_CLASSES))
    ref = jax.block_until_ready(reference_forward(x, params))[:, :NUM_CLASSES]

    assert out.shape == (BATCH, NUM_CLASSES)
    assert out.dtype == jnp.float32
    # bf16 matmul inputs vs f32 reference -> loosened tolerance
    np.testing.assert_allclose(np.asarray(out), np.asarray(ref), rtol=3e-2, atol=3e-2)
    print("KERNEL_OK")
</pallas_src>

<mosaic_0001>
module attributes {stable_mosaic.version = 11 : i64} {
  func.func @fused_bert_lstm_kernel(%arg0: i32, %arg1: memref<16x32xbf16, #tpu.memory_space<vmem>>, %arg2: memref<2x32x96xbf16, #tpu.memory_space<vmem>>, %arg3: memref<2x1x96xf32, #tpu.memory_space<vmem>>, %arg4: memref<32x128xbf16, #tpu.memory_space<vmem>>, %arg5: memref<1x128xf32, #tpu.memory_space<vmem>>, %arg6: memref<16x128xf32, #tpu.memory_space<vmem>>) attributes {dimension_semantics = [#tpu.dimension_semantics<parallel>], iteration_bounds = array<i64: 1>, scalar_prefetch = 0 : i64, scratch_operands = 0 : i64, tpu.core_type = #tpu.core_type<tc>, window_params = [{transform_indices = @transform_0, window_bounds = array<i64: 16, 32>}, {pipeline_mode = #tpu.pipeline_mode<synchronous>, transform_indices = @transform_1, window_bounds = array<i64: 2, 32, 96>}, {pipeline_mode = #tpu.pipeline_mode<synchronous>, transform_indices = @transform_2, window_bounds = array<i64: 2, 1, 96>}, {pipeline_mode = #tpu.pipeline_mode<synchronous>, transform_indices = @transform_3, window_bounds = array<i64: 32, 128>}, {pipeline_mode = #tpu.pipeline_mode<synchronous>, transform_indices = @transform_4, window_bounds = array<i64: 1, 128>}, {transform_indices = @transform_5, window_bounds = array<i64: 16, 128>}]} {
    %c0 = arith.constant 0 : index
    %c0_0 = arith.constant 0 : index
    %0 = vector.load %arg1[%c0, %c0_0] : memref<16x32xbf16, #tpu.memory_space<vmem>>, vector<16x32xbf16>
    %c0_1 = arith.constant 0 : index
    %c0_2 = arith.constant 0 : index
    %c0_3 = arith.constant 0 : index
    %1 = vector.load %arg2[%c0_1, %c0_2, %c0_3] : memref<2x32x96xbf16, #tpu.memory_space<vmem>>, vector<1x32x96xbf16>
    %2 = vector.shape_cast %1 : vector<1x32x96xbf16> to vector<32x96xbf16>
    %cst = arith.constant dense<0.000000e+00> : vector<16x96xf32>
    %3 = tpu.matmul %0, %2, %cst {dimension_numbers = #tpu.dot_dimension_numbers<[1], [0], [0], [1], [0, 0, 1, 1], [], []>} : vector<16x32xbf16>, vector<32x96xbf16>, vector<16x96xf32> -> vector<16x96xf32>
    %c0_4 = arith.constant 0 : index
    %c0_5 = arith.constant 0 : index
    %c0_6 = arith.constant 0 : index
    %4 = vector.load %arg3[%c0_4, %c0_5, %c0_6] : memref<2x1x96xf32, #tpu.memory_space<vmem>>, vector<1x1x96xf32>
    %5 = vector.shape_cast %4 : vector<1x1x96xf32> to vector<1x96xf32>
    %6 = vector.broadcast %5 : vector<1x96xf32> to vector<16x96xf32>
    %7 = arith.addf %3, %6 : vector<16x96xf32>
    %8 = vector.extract_strided_slice %7 {offsets = [0, 0], sizes = [16, 32], strides = [1, 1]} : vector<16x96xf32> to vector<16x32xf32>
    %9 = arith.negf %8 : vector<16x32xf32>
    %10 = math.exp %9 : vector<16x32xf32>
    %cst_7 = arith.constant 1.000000e+00 : f32
    %11 = vector.broadcast %cst_7 : f32 to vector<16x32xf32>
    %12 = arith.addf %11, %10 : vector<16x32xf32>
    %13 = arith.divf %11, %12 : vector<16x32xf32>
    %14 = vector.extract_strided_slice %7 {offsets = [0, 32], sizes = [16, 32], strides = [1, 1]} : vector<16x96xf32> to vector<16x32xf32>
    %15 = math.tanh %14 : vector<16x32xf32>
    %16 = vector.extract_strided_slice %7 {offsets = [0, 64], sizes = [16, 32], strides = [1, 1]} : vector<16x96xf32> to vector<16x32xf32>
    %17 = arith.negf %16 : vector<16x32xf32>
    %18 = math.exp %17 : vector<16x32xf32>
    %cst_8 = arith.constant 1.000000e+00 : f32
    %19 = vector.broadcast %cst_8 : f32 to vector<16x32xf32>
    %20 = arith.addf %19, %18 : vector<16x32xf32>
    %21 = arith.divf %19, %20 : vector<16x32xf32>
    %22 = arith.mulf %13, %15 : vector<16x32xf32>
    %23 = math.tanh %22 : vector<16x32xf32>
    %24 = arith.mulf %21, %23 : vector<16x32xf32>
    %25 = arith.truncf %24 : vector<16x32xf32> to vector<16x32xbf16>
    %c1 = arith.constant 1 : index
    %c0_9 = arith.constant 0 : index
    %c0_10 = arith.constant 0 : index
    %26 = vector.load %arg2[%c1, %c0_9, %c0_10] : memref<2x32x96xbf16, #tpu.memory_space<vmem>>, vector<1x32x96xbf16>
    %27 = vector.shape_cast %26 : vector<1x32x96xbf16> to vector<32x96xbf16>
    %cst_11 = arith.constant dense<0.000000e+00> : vector<16x96xf32>
    %28 = tpu.matmul %25, %27, %cst_11 {dimension_numbers = #tpu.dot_dimension_numbers<[1], [0], [0], [1], [0, 0, 1, 1], [], []>} : vector<16x32xbf16>, vector<32x96xbf16>, vector<16x96xf32> -> vector<16x96xf32>
    %c1_12 = arith.constant 1 : index
    %c0_13 = arith.constant 0 : index
    %c0_14 = arith.constant 0 : index
    %29 = vector.load %arg3[%c1_12, %c0_13, %c0_14] : memref<2x1x96xf32, #tpu.memory_space<vmem>>, vector<1x1x96xf32>
    %30 = vector.shape_cast %29 : vector<1x1x96xf32> to vector<1x96xf32>
    %31 = vector.broadcast %30 : vector<1x96xf32> to vector<16x96xf32>
    %32 = arith.addf %28, %31 : vector<16x96xf32>
    %33 = vector.extract_strided_slice %32 {offsets = [0, 0], sizes = [16, 32], strides = [1, 1]} : vector<16x96xf32> to vector<16x32xf32>
    %34 = arith.negf %33 : vector<16x32xf32>
    %35 = math.exp %34 : vector<16x32xf32>
    %cst_15 = arith.constant 1.000000e+00 : f32
    %36 = vector.broadcast %cst_15 : f32 to vector<16x32xf32>
    %37 = arith.addf %36, %35 : vector<16x32xf32>
    %38 = arith.divf %36, %37 : vector<16x32xf32>
    %39 = vector.extract_strided_slice %32 {offsets = [0, 32], sizes = [16, 32], strides = [1, 1]} : vector<16x96xf32> to vector<16x32xf32>
    %40 = math.tanh %39 : vector<16x32xf32>
    %41 = vector.extract_strided_slice %32 {offsets = [0, 64], sizes = [16, 32], strides = [1, 1]} : vector<16x96xf32> to vector<16x32xf32>
    %42 = arith.negf %41 : vector<16x32xf32>
    %43 = math.exp %42 : vector<16x32xf32>
    %cst_16 = arith.constant 1.000000e+00 : f32
    %44 = vector.broadcast %cst_16 : f32 to vector<16x32xf32>
    %45 = arith.addf %44, %43 : vector<16x32xf32>
    %46 = arith.divf %44, %45 : vector<16x32xf32>
    %47 = arith.mulf %38, %40 : vector<16x32xf32>
    %48 = math.tanh %47 : vector<16x32xf32>
    %49 = arith.mulf %46, %48 : vector<16x32xf32>
    %50 = arith.truncf %49 : vector<16x32xf32> to vector<16x32xbf16>
    %c0_17 = arith.constant 0 : index
    %c0_18 = arith.constant 0 : index
    %51 = vector.load %arg4[%c0_17, %c0_18] : memref<32x128xbf16, #tpu.memory_space<vmem>>, vector<32x128xbf16>
    %cst_19 = arith.constant dense<0.000000e+00> : vector<16x128xf32>
    %52 = tpu.matmul %50, %51, %cst_19 {dimension_numbers = #tpu.dot_dimension_numbers<[1], [0], [0], [1], [0, 0, 1, 1], [], []>} : vector<16x32xbf16>, vector<32x128xbf16>, vector<16x128xf32> -> vector<16x128xf32>
    %c0_20 = arith.constant 0 : index
    %c0_21 = arith.constant 0 : index
    %53 = vector.load %arg5[%c0_20, %c0_21] : memref<1x128xf32, #tpu.memory_space<vmem>>, vector<1x128xf32>
    %54 = vector.broadcast %53 : vector<1x128xf32> to vector<16x128xf32>
    %55 = arith.addf %52, %54 : vector<16x128xf32>
    %c0_22 = arith.constant 0 : index
    %c0_23 = arith.constant 0 : index
    %56 = vector.load %arg6[%c0_22, %c0_23] : memref<16x128xf32, #tpu.memory_space<vmem>>, vector<16x128xf32>
    tpu.vector_store %arg6[%c0_22, %c0_23], %55 {strides = array<i32>} : memref<16x128xf32, #tpu.memory_space<vmem>>, vector<16x128xf32>,
    return
  }
  func.func @transform_0(%arg0: i32) -> (i32, i32) {
    %c0_i32 = arith.constant 0 : i32
    %c0_i32_0 = arith.constant 0 : i32
    return %arg0, %c0_i32 : i32, i32
  }
  func.func @transform_1(%arg0: i32) -> (i32, i32, i32) {
    %c0_i32 = arith.constant 0 : i32
    %c0_i32_0 = arith.constant 0 : i32
    %c0_i32_1 = arith.constant 0 : i32
    %c0_i32_2 = arith.constant 0 : i32
    return %c0_i32, %c0_i32_0, %c0_i32_1 : i32, i32, i32
  }
  func.func @transform_2(%arg0: i32) -> (i32, i32, i32) {
    %c0_i32 = arith.constant 0 : i32
    %c0_i32_0 = arith.constant 0 : i32
    %c0_i32_1 = arith.constant 0 : i32
    %c0_i32_2 = arith.constant 0 : i32
    return %c0_i32, %c0_i32_0, %c0_i32_1 : i32, i32, i32
  }
  func.func @transform_3(%arg0: i32) -> (i32, i32) {
    %c0_i32 = arith.constant 0 : i32
    %c0_i32_0 = arith.constant 0 : i32
    %c0_i32_1 = arith.constant 0 : i32
    return %c0_i32, %c0_i32_0 : i32, i32
  }
  func.func @transform_4(%arg0: i32) -> (i32, i32) {
    %c0_i32 = arith.constant 0 : i32
    %c0_i32_0 = arith.constant 0 : i32
    %c0_i32_1 = arith.constant 0 : i32
    return %c0_i32, %c0_i32_0 : i32, i32
  }
  func.func @transform_5(%arg0: i32) -> (i32, i32) {
    %c0_i32 = arith.constant 0 : i32
    %c0_i32_0 = arith.constant 0 : i32
    return %arg0, %c0_i32 : i32, i32
  }
}

</mosaic_0001>

<llo_original>
// kernel: tpu_custom_call.1
$region0: #{tpu_custom_call.1}
  #allocation0 [shape = 'u32[]', space=smem, size = 0x4, offset = 0x4, fixed_abs, tag = 'smem constant byte address 0x4 - core index']
  #allocation1 [shape = 'u32[144,128]{1,0:T(1,128)}', space=vmem, size = 0x12000, scoped, tag = 'internal scratch']
  %s0 = inlined_call_operand.hbm [shape: bf16[16,32], index: 0, kind: input, shape index: {}]
  %s1 = inlined_call_operand.hbm [shape: bf16[2,32,96], index: 1, kind: input, shape index: {}]
  %s2 = inlined_call_operand.vmem [shape: f32[2,1,96], index: 2, kind: input, shape index: {}]
  %s3 = inlined_call_operand.hbm [shape: bf16[32,128], index: 3, kind: input, shape index: {}]
  %s4 = inlined_call_operand.vmem [shape: f32[1,128], index: 4, kind: input, shape index: {}]
  %s5 = inlined_call_operand.hbm [shape: f32[16,128], index: 5, kind: output, shape index: {}]
  %s6 = sld [smem:[#allocation0]]
  $region42: #{tpu_custom_call.1} parent=0
    _
  %s8 = ssub.s32 1, %s6
  %s9 = scalar_select 0, %s8, %s6
  $region1: #{tpu_custom_call.1} parent=0
    #allocation2 [shape = 'u8[4096]{0}', space=vmem, size = 0x1000, scoped, tag = 'input window, operand 0, single buffered']
    #allocation3 [shape = 's32[1]{0}', space=sflag, size = 0x4, scoped, tag = 'scoped memory for tpu_custom_call.1']
    #allocation4 [shape = 's32[1]{0}', space=sflag, size = 0x4, scoped, tag = 'scoped memory for tpu_custom_call.1']
    #allocation5 [shape = 'u8[16384]{0}', space=vmem, size = 0x4000, scoped, tag = 'input window, operand 1, single buffered']
    #allocation6 [shape = 's32[1]{0}', space=sflag, size = 0x4, scoped, tag = 'scoped memory for tpu_custom_call.1']
    #allocation7 [shape = 'u8[8192]{0}', space=vmem, size = 0x2000, scoped, tag = 'input window, operand 3, single buffered']
    #allocation8 [shape = 'u8[8192]{0}', space=vmem, size = 0x2000, scoped, tag = 'output window, operand 0, single buffered']
    %10 = vsyncpa [#allocation3], 0
    %11 = vsyncpa [#allocation6], 0
    %12 = vsyncpa [#allocation4], 0
    // Predicated region
    $region2: #{tpu_custom_call.1} parent=1 // pred_check
      _
    $region3: #{tpu_custom_call.1} parent=1 // pred_check_branch
      %14 = sbr.rel (0) target = $region5
    $region4: #{tpu_custom_call.1} parent=1 // pred_region
      %s16 = ssub.s32 128, 128
      %17 = vsyncadd [#allocation3], %s16
      %s18 = sshll.u32 [#allocation2], 4
      %s19 = int_to_ptr.vmem [resolvable:$true] %s18
      %24 = dma.hbm_to_vmem [thread:$0]  %s0, 128, %s19, [#allocation3], 64, 64, 4
    $region5: #{tpu_custom_call.1} parent=1 // pred_fallthru
      _
    // Predicated region
    $region6: #{tpu_custom_call.1} parent=1 // pred_check
      _
    $region7: #{tpu_custom_call.1} parent=1 // pred_check_branch
      %26 = sbr.rel (0) target = $region9
    $region8: #{tpu_custom_call.1} parent=1 // pred_region
      %s28 = ssub.s32 512, 512
      %29 = vsyncadd [#allocation6], %s28
      %s30 = sshll.u32 [#allocation5], 4
      %s31 = int_to_ptr.vmem [resolvable:$true] %s30
      %36 = dma.hbm_to_vmem [thread:$0]  %s1, 512, %s31, [#allocation6], 64, 64, 4
    $region9: #{tpu_custom_call.1} parent=1 // pred_fallthru
      _
    // Predicated region
    $region10: #{tpu_custom_call.1} parent=1 // pred_check
      _
    $region11: #{tpu_custom_call.1} parent=1 // pred_check_branch
      %38 = sbr.rel (0) target = $region13
    $region12: #{tpu_custom_call.1} parent=1 // pred_region
      _
    $region13: #{tpu_custom_call.1} parent=1 // pred_fallthru
      _
    // Predicated region
    $region14: #{tpu_custom_call.1} parent=1 // pred_check
      _
    $region15: #{tpu_custom_call.1} parent=1 // pred_check_branch
      %40 = sbr.rel (0) target = $region17
    $region16: #{tpu_custom_call.1} parent=1 // pred_region
      %s42 = ssub.s32 256, 256
      %43 = vsyncadd [#allocation6], %s42
      %s44 = sshll.u32 [#allocation7], 4
      %s45 = int_to_ptr.vmem [resolvable:$true] %s44
      %50 = dma.hbm_to_vmem [thread:$0]  %s3, 256, %s45, [#allocation6], 64, 64, 4
    $region17: #{tpu_custom_call.1} parent=1 // pred_fallthru
      _
    // Predicated region
    $region18: #{tpu_custom_call.1} parent=1 // pred_check
      _
    $region19: #{tpu_custom_call.1} parent=1 // pred_check_branch
      %52 = sbr.rel (0) target = $region21
    $region20: #{tpu_custom_call.1} parent=1 // pred_region
      _
    $region21: #{tpu_custom_call.1} parent=1 // pred_fallthru
      _
    // Predicated region
    $region22: #{tpu_custom_call.1} parent=1 // pred_check
      _
    $region23: #{tpu_custom_call.1} parent=1 // pred_check_branch
      %54 = sbr.rel (0) target = $region25
    $region24: #{tpu_custom_call.1} parent=1 // pred_region
      %55 = dma.done [#allocation3], 128
    $region25: #{tpu_custom_call.1} parent=1 // pred_fallthru
      _
    // Predicated region
    $region26: #{tpu_custom_call.1} parent=1 // pred_check
      _
    $region27: #{tpu_custom_call.1} parent=1 // pred_check_branch
      %57 = sbr.rel (0) target = $region29
    $region28: #{tpu_custom_call.1} parent=1 // pred_region
      %58 = dma.done [#allocation6], 512
    $region29: #{tpu_custom_call.1} parent=1 // pred_fallthru
      _
    // Predicated region
    $region30: #{tpu_custom_call.1} parent=1 // pred_check
      _
    $region31: #{tpu_custom_call.1} parent=1 // pred_check_branch
      %60 = sbr.rel (0) target = $region33
    $region32: #{tpu_custom_call.1} parent=1 // pred_region
      %61 = dma.done [#allocation6], 256
    $region33: #{tpu_custom_call.1} parent=1 // pred_fallthru
      _
    %v63 = vld [vmem:[#allocation2] sm:$0xf]
    %v64 = vld [vmem:[#allocation2 + $0x4] sm:$0xf]
    %v65 = vld [vmem:[#allocation5] sm:$0xf]
    %v66 = vld [vmem:[#allocation5 + $0x4] sm:$0xf]
    %v67 = vld [vmem:[#allocation5 + $0x8] sm:$0xf]
    %v68 = vld [vmem:[#allocation5 + $0xc] sm:$0xf]
    %v69 = vld [vmem:[%s2] sm:$0x1]
    %v71 = vlaneseq
    %v72 = vshrl.u32 %v71, 7
    %v73 = vsub.s32 0, %v72
    %v74 = vrot.slane %v69, %v73
    %v78 = vunpack.c.l.b16 %v63
    %v79 = vunpack.c.l.b16 %v64
    %v80 = vpack.c.b16 %v79, %v78
    %v85 = vunpack.c.l.b16 %v65
    %v86 = vunpack.c.l.b16 %v66
    %v87 = vunpack.c.l.b16 %v67
    %v88 = vunpack.c.l.b16 %v68
    %v89 = vpack.c.b16 %v86, %v85
    %v90 = vpack.c.b16 %v88, %v87
    %vm93 = vcmask 261120
    %v95 = vsel %vm93, %v80, 0
    %97 = vmatprep.subr.bf16.mxu0 0
    %98 = vmatpush1.bf16.msra.mxu0 %v89
    %99 = vmatprep.subr.bf16.mxu0 0
    %100 = vmatpush1.bf16.msra.mxu0 %v90
    %101 = vmatprep.subr.bf16.mxu0 0
    %102 = vmatpush1.bf16.msra.mxu0 0
    %103 = vmatprep.subr.bf16.mxu0 0
    %104 = vmatpush1.bf16.msra.mxu0 0
    %105 = vmatprep.subr.bf16.mxu0 0
    %106 = vmatpush1.bf16.msra.mxu0 0
    %107 = vmatprep.subr.bf16.mxu0 0
    %108 = vmatpush1.bf16.msra.mxu0 0
    %109 = vmatprep.subr.bf16.mxu0 0
    %110 = vmatpush1.bf16.msra.mxu0 0
    %111 = vmatprep.subr.bf16.mxu0 0
    %112 = vmatpush1.bf16.msra.mxu0 0
    %113 = vmatprep.subr.bf16.mxu0 0
    %114 = vmatpush1.bf16.msra.mxu0 0
    %115 = vmatprep.subr.bf16.mxu0 0
    %116 = vmatpush1.bf16.msra.mxu0 0
    %117 = vmatprep.subr.bf16.mxu0 0
    %118 = vmatpush1.bf16.msra.mxu0 0
    %119 = vmatprep.subr.bf16.mxu0 0
    %120 = vmatpush1.bf16.msra.mxu0 0
    %121 = vmatprep.subr.bf16.mxu0 0
    %122 = vmatpush1.bf16.msra.mxu0 0
    %123 = vmatprep.subr.bf16.mxu0 0
    %124 = vmatpush1.bf16.msra.mxu0 0
    %125 = vmatprep.subr.bf16.mxu0 0
    %126 = vmatpush1.bf16.msra.mxu0 0
    %127 = vmatprep.subr.bf16.mxu0 0
    %128 = vmatpush1.bf16.msra.mxu0 0
    %129 = vmatprep.mubr.bf16.mxu0 0
    %130 = vmatmul.mubr.bf16.gmra.mrb[0].mxu0 %v95
    %v131 = vpop.f32.mrb[0].mxu0
    %v132 = vadd.f32 %v74, %v131
    %v133 = vpop.f32.mrb[0].mxu0
    %v134 = vpop.f32.mrb[0].mxu0
    %v135 = vadd.f32 %v74, %v134
    %v136 = vpop.f32.mrb[0].mxu0
    %137 = vdwg.mxu0
    %v138 = vxor.u32 %v132, 2147483648
    %v139 = vxor.u32 %v135, 2147483648
    %v140 = vmul.f32 %v138, 1.442695
    %v141 = vpow.pop %v140
    %v142 = vmul.f32 %v139, 1.442695
    %v143 = vpow.pop %v142
    %v144 = vadd.f32 %v141, 1.0
    %v145 = vadd.f32 %v143, 1.0
    %v146 = vrcp.pop %v144
    %v147 = vmul.f32 1.0, %v146
    %v148 = vrcp.pop %v145
    %v149 = vmul.f32 1.0, %v148
    %v150 = vtanh.pop %v132
    %v151 = vtanh.pop %v135
    %154 = vrot.lane.b32.xlu0 %v150, 96
    %v155 = vpop.permute.xlu0 %154
    %156 = vrot.lane.b32.xlu0 %v151, 96
    %v157 = vpop.permute.xlu0 %156
    %v160 = vmul.f32 %v147, %v155
    %v161 = vmul.f32 %v149, %v157
    %v162 = vtanh.pop %v160
    %v163 = vtanh.pop %v161
    %166 = vrot.lane.b32.xlu0 %v162, 64
    %v167 = vpop.permute.xlu0 %166
    %168 = vrot.lane.b32.xlu0 %v163, 64
    %v169 = vpop.permute.xlu0 %168
    %v172 = vmul.f32 %v147, %v167
    %v173 = vmul.f32 %v149, %v169
    %v174 = vpack.c.bf16 %v173, %v172
    %s175 = scalar_lea.vmem [#allocation5], 16
    %v176 = vld [vmem:[%s175] sm:$0xf]
    %v177 = vld [vmem:[%s175 + $0x4] sm:$0xf]
    %v178 = vld [vmem:[%s175 + $0x8] sm:$0xf]
    %v179 = vld [vmem:[%s175 + $0xc] sm:$0xf]
    %s180 = scalar_lea.vmem %s2, 1
    %v181 = vld [vmem:[%s180] sm:$0x1]
    %v183 = vlaneseq
    %v184 = vshrl.u32 %v183, 7
    %v185 = vsub.s32 0, %v184
    %v186 = vrot.slane %v181, %v185
    %189 = vrot.lane.b32.xlu0 %v174, 64
    %v190 = vpop.permute.xlu0 %189
    %v195 = vunpack.c.l.b16 %v176
    %v196 = vunpack.c.l.b16 %v177
    %v197 = vunpack.c.l.b16 %v178
    %v198 = vunpack.c.l.b16 %v179
    %v199 = vpack.c.b16 %v196, %v195
    %v200 = vpack.c.b16 %v198, %v197
    %v204 = vsel %vm93, %v190, 0
    %206 = vmatprep.subr.bf16.mxu0 0
    %207 = vmatpush1.bf16.msra.mxu0 %v199
    %208 = vmatprep.subr.bf16.mxu0 0
    %209 = vmatpush1.bf16.msra.mxu0 %v200
    %210 = vmatprep.subr.bf16.mxu0 0
    %211 = vmatpush1.bf16.msra.mxu0 0
    %212 = vmatprep.subr.bf16.mxu0 0
    %213 = vmatpush1.bf16.msra.mxu0 0
    %214 = vmatprep.subr.bf16.mxu0 0
    %215 = vmatpush1.bf16.msra.mxu0 0
    %216 = vmatprep.subr.bf16.mxu0 0
    %217 = vmatpush1.bf16.msra.mxu0 0
    %218 = vmatprep.subr.bf16.mxu0 0
    %219 = vmatpush1.bf16.msra.mxu0 0
    %220 = vmatprep.subr.bf16.mxu0 0
    %221 = vmatpush1.bf16.msra.mxu0 0
    %222 = vmatprep.subr.bf16.mxu0 0
    %223 = vmatpush1.bf16.msra.mxu0 0
    %224 = vmatprep.subr.bf16.mxu0 0
    %225 = vmatpush1.bf16.msra.mxu0 0
    %226 = vmatprep.subr.bf16.mxu0 0
    %227 = vmatpush1.bf16.msra.mxu0 0
    %228 = vmatprep.subr.bf16.mxu0 0
    %229 = vmatpush1.bf16.msra.mxu0 0
    %230 = vmatprep.subr.bf16.mxu0 0
    %231 = vmatpush1.bf16.msra.mxu0 0
    %232 = vmatprep.subr.bf16.mxu0 0
    %233 = vmatpush1.bf16.msra.mxu0 0
    %234 = vmatprep.subr.bf16.mxu0 0
    %235 = vmatpush1.bf16.msra.mxu0 0
    %236 = vmatprep.subr.bf16.mxu0 0
    %237 = vmatpush1.bf16.msra.mxu0 0
    %238 = vmatprep.mubr.bf16.mxu0 0
    %239 = vmatmul.mubr.bf16.gmra.mrb[0].mxu0 %v204
    %v240 = vpop.f32.mrb[0].mxu0
    %v241 = vadd.f32 %v186, %v240
    %v242 = vpop.f32.mrb[0].mxu0
    %v243 = vpop.f32.mrb[0].mxu0
    %v244 = vadd.f32 %v186, %v243
    %v245 = vpop.f32.mrb[0].mxu0
    %246 = vdwg.mxu0
    %v247 = vxor.u32 %v241, 2147483648
    %v248 = vxor.u32 %v244, 2147483648
    %v249 = vmul.f32 %v247, 1.442695
    %v250 = vpow.pop %v249
    %v251 = vmul.f32 %v248, 1.442695
    %v252 = vpow.pop %v251
    %v253 = vadd.f32 %v250, 1.0
    %v254 = vadd.f32 %v252, 1.0
    %v255 = vrcp.pop %v253
    %v256 = vmul.f32 1.0, %v255
    %v257 = vrcp.pop %v254
    %v258 = vmul.f32 1.0, %v257
    %v259 = vtanh.pop %v241
    %v260 = vtanh.pop %v244
    %263 = vrot.lane.b32.xlu0 %v259, 96
    %v264 = vpop.permute.xlu0 %263
    %265 = vrot.lane.b32.xlu0 %v260, 96
    %v266 = vpop.permute.xlu0 %265
    %v269 = vmul.f32 %v256, %v264
    %v270 = vmul.f32 %v258, %v266
    %v271 = vtanh.pop %v269
    %v272 = vtanh.pop %v270
    %275 = vrot.lane.b32.xlu0 %v271, 64
    %v276 = vpop.permute.xlu0 %275
    %277 = vrot.lane.b32.xlu0 %v272, 64
    %v278 = vpop.permute.xlu0 %277
    %v281 = vmul.f32 %v256, %v276
    %v282 = vmul.f32 %v258, %v278
    %v283 = vpack.c.bf16 %v282, %v281
    %v284 = vld [vmem:[#allocation7] sm:$0xf]
    %v285 = vld [vmem:[#allocation7 + $0x4] sm:$0xf]
    %v286 = vld [vmem:[#allocation7 + $0x8] sm:$0xf]
    %v287 = vld [vmem:[#allocation7 + $0xc] sm:$0xf]
    %v288 = vld [vmem:[%s4] sm:$0x1]
    %v290 = vlaneseq
    %v291 = vshrl.u32 %v290, 7
    %v292 = vsub.s32 0, %v291
    %v293 = vrot.slane %v288, %v292
    %296 = vrot.lane.b32.xlu0 %v283, 64
    %v297 = vpop.permute.xlu0 %296
    %v302 = vunpack.c.l.b16 %v284
    %v303 = vunpack.c.l.b16 %v285
    %v304 = vunpack.c.l.b16 %v286
    %v305 = vunpack.c.l.b16 %v287
    %v306 = vpack.c.b16 %v303, %v302
    %v307 = vpack.c.b16 %v305, %v304
    %v311 = vsel %vm93, %v297, 0
    %313 = vmatprep.subr.bf16.mxu0 0
    %314 = vmatpush1.bf16.msra.mxu0 %v306
    %315 = vmatprep.subr.bf16.mxu0 0
    %316 = vmatpush1.bf16.msra.mxu0 %v307
    %317 = vmatprep.subr.bf16.mxu0 0
    %318 = vmatpush1.bf16.msra.mxu0 0
    %319 = vmatprep.subr.bf16.mxu0 0
    %320 = vmatpush1.bf16.msra.mxu0 0
    %321 = vmatprep.subr.bf16.mxu0 0
    %322 = vmatpush1.bf16.msra.mxu0 0
    %323 = vmatprep.subr.bf16.mxu0 0
    %324 = vmatpush1.bf16.msra.mxu0 0
    %325 = vmatprep.subr.bf16.mxu0 0
    %326 = vmatpush1.bf16.msra.mxu0 0
    %327 = vmatprep.subr.bf16.mxu0 0
    %328 = vmatpush1.bf16.msra.mxu0 0
    %329 = vmatprep.subr.bf16.mxu0 0
    %330 = vmatpush1.bf16.msra.mxu0 0
    %331 = vmatprep.subr.bf16.mxu0 0
    %332 = vmatpush1.bf16.msra.mxu0 0
    %333 = vmatprep.subr.bf16.mxu0 0
    %334 = vmatpush1.bf16.msra.mxu0 0
    %335 = vmatprep.subr.bf16.mxu0 0
    %336 = vmatpush1.bf16.msra.mxu0 0
    %337 = vmatprep.subr.bf16.mxu0 0
    %338 = vmatpush1.bf16.msra.mxu0 0
    %339 = vmatprep.subr.bf16.mxu0 0
    %340 = vmatpush1.bf16.msra.mxu0 0
    %341 = vmatprep.subr.bf16.mxu0 0
    %342 = vmatpush1.bf16.msra.mxu0 0
    %343 = vmatprep.subr.bf16.mxu0 0
    %344 = vmatpush1.bf16.msra.mxu0 0
    %345 = vmatprep.mubr.bf16.mxu0 0
    %346 = vmatmul.mubr.bf16.gmra.mrb[0].mxu0 %v311
    %v347 = vpop.f32.mrb[0].mxu0
    %v348 = vadd.f32 %v293, %v347
    %v349 = vpop.f32.mrb[0].mxu0
    %v350 = vpop.f32.mrb[0].mxu0
    %v351 = vadd.f32 %v293, %v350
    %v352 = vpop.f32.mrb[0].mxu0
    %353 = vdwg.mxu0
    %354 = vst [vmem:[#allocation8] sm:$0xff] %v348
    %355 = vst [vmem:[#allocation8 + $0x8] sm:$0xff] %v351
    // Predicated region
    $region34: #{tpu_custom_call.1} parent=1 // pred_check
      _
    $region35: #{tpu_custom_call.1} parent=1 // pred_check_branch
      %357 = sbr.rel (0) target = $region37
    $region36: #{tpu_custom_call.1} parent=1 // pred_region
      %s359 = ssub.s32 256, 256
      %360 = vsyncadd [#allocation4], %s359
      %s361 = sshll.u32 [#allocation8], 4
      %s362 = int_to_ptr.vmem [resolvable:$true] %s361
      %367 = dma.vmem_to_hbm [thread:$0]  %s362, 256, %s5, [#allocation4], 128, 128, 8
    $region37: #{tpu_custom_call.1} parent=1 // pred_fallthru
      _
    // Predicated region
    $region38: #{tpu_custom_call.1} parent=1 // pred_check
      _
    $region39: #{tpu_custom_call.1} parent=1 // pred_check_branch
      %369 = sbr.rel (0) target = $region41
    $region40: #{tpu_custom_call.1} parent=1 // pred_region
      %370 = dma.done [#allocation4], 256
    $region41: #{tpu_custom_call.1} parent=1 // pred_fallthru
      _
    %371 = vsyncpa [#allocation3], 1
    %372 = vsyncpa [#allocation6], 1
    %373 = vsyncpa [#allocation4], 1

</llo_original>
